<compile_context>
chip_gen: v7x
topology: tpu7x:2x2x1
jax: 0.10.0
libtpu: 0.0.40
codegen_flags: <defaults>
</compile_context>

<pallas_src>
import functools

import jax
import jax.numpy as jnp
from jax.experimental import pallas as pl
from jax.experimental.pallas import tpu as pltpu


def _round_up(v: int, m: int) -> int:
    return ((v + m - 1) // m) * m


def _node_pool_kernel(batch_ref, x_ref, o_ref, acc_ref, cnt_ref, *,
                      compute_dtype, do_mean):
    # batch_ref: (1, tn) int32   x_ref: (tn, tf)   o_ref: (tg, tf)
    # acc_ref:   (tg, tf) f32    cnt_ref: (tg, 1) f32
    g = pl.program_id(0)
    k = pl.program_id(2)
    tg = o_ref.shape[0]
    tn = x_ref.shape[0]

    @pl.when(k == 0)
    def _():
        acc_ref[...] = jnp.zeros_like(acc_ref)
        cnt_ref[...] = jnp.zeros_like(cnt_ref)

    b = batch_ref[...]                                               # (1, tn) int32
    # Global graph ids covered by this output tile.
    gids = jax.lax.broadcasted_iota(jnp.int32, (tg, tn), 0) + g * tg
    mask = gids == b                                                 # (tg, tn) membership
    # Padded nodes carry batch id -1 and out-of-range ids match no row -> dropped.

    onehot = mask.astype(compute_dtype)                              # exactly {0, 1}
    x_tile = x_ref[...].astype(compute_dtype)
    # Segment sums on the MXU, f32 accumulation.
    acc_ref[...] += jnp.dot(onehot, x_tile, preferred_element_type=jnp.float32)
    # Per-graph node counts (exact f32 integer sums), accumulated over all N tiles.
    cnt_ref[...] += jnp.sum(mask.astype(jnp.float32), axis=1, keepdims=True)

    @pl.when(k == pl.num_programs(2) - 1)
    def _():
        if do_mean:
            # Clamp only after full accumulation: empty graphs -> 0 / 1 = 0.
            inv = pl.reciprocal(jnp.maximum(cnt_ref[...], 1.0), approx=True)
            o_ref[...] = (acc_ref[...] * inv).astype(o_ref.dtype)
        else:
            o_ref[...] = acc_ref[...].astype(o_ref.dtype)


def basic_node_pool(x, batch, num_graphs, *, reduce="mean",
                    tn=512, tf=256, tg=256,
                    compute_dtype=jnp.bfloat16):
    """Pallas TPU equivalent of BasicNodePool(reduce).forward(x, batch).

    num_graphs must be a static Python int (avoids a host sync + per-G recompile).
    batch ids outside [0, num_graphs) are silently dropped (not summed, not counted).
    """
    assert reduce in ("mean", "sum"), "only reduce in {'mean','sum'} implemented"
    N, F = x.shape
    G = int(num_graphs)

    # Tile sizes: clamp to the (padded) problem, keep TPU (8, 128) alignment.
    tg = _round_up(min(tg, _round_up(G, 8)), 8)
    tf = _round_up(min(tf, _round_up(F, 128)), 128)
    tn = _round_up(min(tn, _round_up(N, 128)), 128)

    G_pad = _round_up(G, tg)
    F_pad = _round_up(F, tf)
    N_pad = _round_up(N, tn)

    # Pad: extra nodes get batch id -1 (match no graph); extra features/rows are 0.
    x_p = jnp.pad(x, ((0, N_pad - N), (0, F_pad - F)))
    batch_p = jnp.pad(batch.astype(jnp.int32), (0, N_pad - N), constant_values=-1)
    batch_2d = batch_p.reshape(1, N_pad)

    kernel = functools.partial(_node_pool_kernel,
                               compute_dtype=compute_dtype,
                               do_mean=(reduce == "mean"))

    out = pl.pallas_call(
        kernel,
        out_shape=jax.ShapeDtypeStruct((G_pad, F_pad), x.dtype),
        grid_spec=pltpu.PrefetchScalarGridSpec(
            num_scalar_prefetch=0,
            grid=(G_pad // tg, F_pad // tf, N_pad // tn),
            in_specs=[
                pl.BlockSpec((1, tn), lambda g, f, k: (0, k)),      # batch tile
                pl.BlockSpec((tn, tf), lambda g, f, k: (k, f)),     # x tile
            ],
            out_specs=pl.BlockSpec((tg, tf), lambda g, f, k: (g, f)),
            scratch_shapes=[
                pltpu.VMEM((tg, tf), jnp.float32),                  # sum accumulator
                pltpu.VMEM((tg, 1), jnp.float32),                   # count accumulator
            ],
        ),
        compiler_params=pltpu.CompilerParams(
            dimension_semantics=("parallel", "parallel", "arbitrary"),
            vmem_limit_bytes=48 * 1024 * 1024,
        ),
    )(batch_2d, x_p)

    return out[:G, :F]


if __name__ == "__main__":
    key = jax.random.PRNGKey(0)
    N, F, G = 16, 32, 4  # 16 nodes, 32 features, 4 graphs (small demo shapes)

    kx, kb = jax.random.split(key)
    x = jax.random.normal(kx, (N, F), dtype=jnp.float32)
    # Deterministic graph assignment covering all G graphs.
    batch = jnp.sort(jax.random.randint(kb, (N,), 0, G, dtype=jnp.int32))
    batch = batch.at[0].set(0).at[-1].set(G - 1)  # ensure ids span [0, G)

    out_mean = jax.block_until_ready(basic_node_pool(x, batch, num_graphs=G,
                                                     reduce="mean"))
    out_sum = jax.block_until_ready(basic_node_pool(x, batch, num_graphs=G,
                                                    reduce="sum"))

    # Reference check: plain JAX segment sum / mean (f32).
    seg_sum = jax.ops.segment_sum(x, batch, num_segments=G)
    seg_cnt = jax.ops.segment_sum(jnp.ones((N,), jnp.float32), batch, num_segments=G)
    ref_mean = seg_sum / jnp.maximum(seg_cnt, 1.0)[:, None]
    # bf16 MXU operands + approx reciprocal -> modest tolerance vs the f32 reference.
    assert jnp.allclose(out_mean, ref_mean, atol=3e-2, rtol=3e-2), "mean mismatch"
    assert jnp.allclose(out_sum, seg_sum, atol=3e-2, rtol=3e-2), "sum mismatch"

    print("KERNEL_OK")
</pallas_src>

<mosaic_0001>
module attributes {stable_mosaic.version = 11 : i64} {
  func.func @_node_pool_kernel(%arg0: i32, %arg1: i32, %arg2: i32, %arg3: memref<1x128xi32, #tpu.memory_space<vmem>>, %arg4: memref<128x128xf32, #tpu.memory_space<vmem>>, %arg5: memref<8x128xf32, #tpu.memory_space<vmem>>, %arg6: memref<8x128xf32, #tpu.memory_space<vmem>>, %arg7: memref<8x1xf32, #tpu.memory_space<vmem>>) attributes {dimension_semantics = [#tpu.dimension_semantics<parallel>, #tpu.dimension_semantics<parallel>, #tpu.dimension_semantics<arbitrary>], iteration_bounds = array<i64: 1, 1, 1>, scalar_prefetch = 0 : i64, scratch_operands = 2 : i64, tpu.core_type = #tpu.core_type<tc>, window_params = [{transform_indices = @transform_0, window_bounds = array<i64: 1, 128>}, {transform_indices = @transform_1, window_bounds = array<i64: 128, 128>}, {transform_indices = @transform_2, window_bounds = array<i64: 8, 128>}]} {
    %c0_i32 = arith.constant 0 : i32
    %0 = arith.cmpi eq, %arg2, %c0_i32 : i32
    %1 = arith.extui %0 : i1 to i32
    %c0_i32_0 = arith.constant 0 : i32
    %2 = arith.cmpi ne, %1, %c0_i32_0 : i32
    scf.if %2 {
      %cst_15 = arith.constant 0.000000e+00 : f32
      %29 = vector.broadcast %cst_15 : f32 to vector<8x128xf32>
      %c0_16 = arith.constant 0 : index
      %c0_17 = arith.constant 0 : index
      %30 = vector.load %arg6[%c0_16, %c0_17] : memref<8x128xf32, #tpu.memory_space<vmem>>, vector<8x128xf32>
      tpu.vector_store %arg6[%c0_16, %c0_17], %29 {strides = array<i32>} : memref<8x128xf32, #tpu.memory_space<vmem>>, vector<8x128xf32>,
      %cst_18 = arith.constant 0.000000e+00 : f32
      %31 = vector.broadcast %cst_18 : f32 to vector<8x1xf32>
      %c0_19 = arith.constant 0 : index
      %c0_20 = arith.constant 0 : index
      %32 = vector.load %arg7[%c0_19, %c0_20] : memref<8x1xf32, #tpu.memory_space<vmem>>, vector<8x1xf32>
      tpu.vector_store %arg7[%c0_19, %c0_20], %31 {strides = array<i32>} : memref<8x1xf32, #tpu.memory_space<vmem>>, vector<8x1xf32>,
    } else {
    }
    %c0 = arith.constant 0 : index
    %c0_1 = arith.constant 0 : index
    %3 = vector.load %arg3[%c0, %c0_1] : memref<1x128xi32, #tpu.memory_space<vmem>>, vector<1x128xi32>
    %4 = tpu.iota {dimensions = array<i32: 0>} : vector<8x128xi32>
    %c8_i32 = arith.constant 8 : i32
    %5 = arith.muli %arg0, %c8_i32 : i32
    %6 = vector.broadcast %5 : i32 to vector<8x128xi32>
    %7 = arith.addi %4, %6 : vector<8x128xi32>
    %8 = vector.broadcast %3 : vector<1x128xi32> to vector<8x128xi32>
    %9 = arith.cmpi eq, %7, %8 : vector<8x128xi32>
    %10 = arith.extui %9 : vector<8x128xi1> to vector<8x128xi32>
    %11 = arith.sitofp %10 : vector<8x128xi32> to vector<8x128xf32>
    %12 = arith.truncf %11 : vector<8x128xf32> to vector<8x128xbf16>
    %c0_2 = arith.constant 0 : index
    %c0_3 = arith.constant 0 : index
    %13 = vector.load %arg4[%c0_2, %c0_3] : memref<128x128xf32, #tpu.memory_space<vmem>>, vector<128x128xf32>
    %14 = arith.truncf %13 : vector<128x128xf32> to vector<128x128xbf16>
    %c0_4 = arith.constant 0 : index
    %c0_5 = arith.constant 0 : index
    %15 = vector.load %arg6[%c0_4, %c0_5] : memref<8x128xf32, #tpu.memory_space<vmem>>, vector<8x128xf32>
    %cst = arith.constant dense<0.000000e+00> : vector<8x128xf32>
    %16 = tpu.matmul %12, %14, %cst {dimension_numbers = #tpu.dot_dimension_numbers<[1], [0], [0], [1], [0, 0, 1, 1], [], []>} : vector<8x128xbf16>, vector<128x128xbf16>, vector<8x128xf32> -> vector<8x128xf32>
    %17 = arith.addf %15, %16 : vector<8x128xf32>
    %c0_6 = arith.constant 0 : index
    %c0_7 = arith.constant 0 : index
    %18 = vector.load %arg6[%c0_6, %c0_7] : memref<8x128xf32, #tpu.memory_space<vmem>>, vector<8x128xf32>
    tpu.vector_store %arg6[%c0_6, %c0_7], %17 {strides = array<i32>} : memref<8x128xf32, #tpu.memory_space<vmem>>, vector<8x128xf32>,
    %c0_8 = arith.constant 0 : index
    %c0_9 = arith.constant 0 : index
    %19 = vector.load %arg7[%c0_8, %c0_9] : memref<8x1xf32, #tpu.memory_space<vmem>>, vector<8x1xf32>
    %20 = arith.extui %9 : vector<8x128xi1> to vector<8x128xi32>
    %21 = arith.sitofp %20 : vector<8x128xi32> to vector<8x128xf32>
    %cst_10 = arith.constant dense<0.000000e+00> : vector<8xf32>
    %22 = vector.multi_reduction <add>, %21, %cst_10 [1] : vector<8x128xf32> to vector<8xf32>
    %23 = vector.shape_cast %22 : vector<8xf32> to vector<8x1xf32>
    %24 = arith.addf %19, %23 : vector<8x1xf32>
    %c0_11 = arith.constant 0 : index
    %c0_12 = arith.constant 0 : index
    %25 = vector.load %arg7[%c0_11, %c0_12] : memref<8x1xf32, #tpu.memory_space<vmem>>, vector<8x1xf32>
    tpu.vector_store %arg7[%c0_11, %c0_12], %24 {strides = array<i32>} : memref<8x1xf32, #tpu.memory_space<vmem>>, vector<8x1xf32>,
    %c0_i32_13 = arith.constant 0 : i32
    %26 = arith.cmpi eq, %arg2, %c0_i32_13 : i32
    %27 = arith.extui %26 : i1 to i32
    %c0_i32_14 = arith.constant 0 : i32
    %28 = arith.cmpi ne, %27, %c0_i32_14 : i32
    scf.if %28 {
      %c0_15 = arith.constant 0 : index
      %c0_16 = arith.constant 0 : index
      %29 = vector.load %arg7[%c0_15, %c0_16] : memref<8x1xf32, #tpu.memory_space<vmem>>, vector<8x1xf32>
      %cst_17 = arith.constant 1.000000e+00 : f32
      %30 = vector.broadcast %cst_17 : f32 to vector<8x1xf32>
      %31 = arith.maximumf %29, %30 : vector<8x1xf32>
      %32 = tpu.reciprocal %31 {approx = true} : vector<8x1xf32> -> vector<8x1xf32>
      %c0_18 = arith.constant 0 : index
      %c0_19 = arith.constant 0 : index
      %33 = vector.load %arg6[%c0_18, %c0_19] : memref<8x128xf32, #tpu.memory_space<vmem>>, vector<8x128xf32>
      %34 = vector.broadcast %32 : vector<8x1xf32> to vector<8x128xf32>
      %35 = arith.mulf %33, %34 : vector<8x128xf32>
      %c0_20 = arith.constant 0 : index
      %c0_21 = arith.constant 0 : index
      %36 = vector.load %arg5[%c0_20, %c0_21] : memref<8x128xf32, #tpu.memory_space<vmem>>, vector<8x128xf32>
      tpu.vector_store %arg5[%c0_20, %c0_21], %35 {strides = array<i32>} : memref<8x128xf32, #tpu.memory_space<vmem>>, vector<8x128xf32>,
    } else {
    }
    return
  }
  func.func @transform_0(%arg0: i32, %arg1: i32, %arg2: i32) -> (i32, i32) {
    %c0_i32 = arith.constant 0 : i32
    %c0_i32_0 = arith.constant 0 : i32
    return %c0_i32, %arg2 : i32, i32
  }
  func.func @transform_1(%arg0: i32, %arg1: i32, %arg2: i32) -> (i32, i32) {
    %c0_i32 = arith.constant 0 : i32
    return %arg2, %arg1 : i32, i32
  }
  func.func @transform_2(%arg0: i32, %arg1: i32, %arg2: i32) -> (i32, i32) {
    %c0_i32 = arith.constant 0 : i32
    return %arg0, %arg1 : i32, i32
  }
}

</mosaic_0001>

<llo_original>
// kernel: tpu_custom_call.1
$region0: #{tpu_custom_call.1}
  #allocation0 [shape = 'u32[]', space=smem, size = 0x4, offset = 0x4, fixed_abs, tag = 'smem constant byte address 0x4 - core index']
  #allocation1 [shape = 'u32[144,128]{1,0:T(1,128)}', space=vmem, size = 0x12000, scoped, tag = 'internal scratch']
  #allocation2 [shape = 'f32[8,128]{1,0:T(8,128)}', space=vmem, size = 0x1000, scoped, tag = 'scratch operand']
  #allocation3 [shape = 'f32[8,1]{1,0:T(8,128)}', space=vmem, size = 0x1000, scoped, tag = 'scratch operand']
  %s0 = inlined_call_operand.hbm [shape: s32[1,128], index: 0, kind: input, shape index: {}]
  %s1 = inlined_call_operand.hbm [shape: f32[128,128], index: 1, kind: input, shape index: {}]
  %s2 = inlined_call_operand.hbm [shape: f32[8,128], index: 2, kind: output, shape index: {}]
  %s3 = sld [smem:[#allocation0]]
  $region34: #{tpu_custom_call.1} parent=0
    _
  %s5 = ssub.s32 1, %s3
  %s6 = scalar_select 0, %s5, %s3
  $region1: #{tpu_custom_call.1} parent=0
    #allocation4 [shape = 'u8[512]{0}', space=vmem, size = 0x400, scoped, tag = 'input window, operand 0, single buffered']
    #allocation5 [shape = 's32[1]{0}', space=sflag, size = 0x4, scoped, tag = 'scoped memory for tpu_custom_call.1']
    #allocation6 [shape = 's32[1]{0}', space=sflag, size = 0x4, scoped, tag = 'scoped memory for tpu_custom_call.1']
    #allocation7 [shape = 'u8[65536]{0}', space=vmem, size = 0x10000, scoped, tag = 'input window, operand 1, single buffered']
    #allocation8 [shape = 's32[1]{0}', space=sflag, size = 0x4, scoped, tag = 'scoped memory for tpu_custom_call.1']
    #allocation9 [shape = 'u8[4096]{0}', space=vmem, size = 0x1000, scoped, tag = 'output window, operand 0, single buffered']
    %7 = vsyncpa [#allocation5], 0
    %8 = vsyncpa [#allocation8], 0
    %9 = vsyncpa [#allocation6], 0
    // Predicated region
    $region2: #{tpu_custom_call.1} parent=1 // pred_check
      _
    $region3: #{tpu_custom_call.1} parent=1 // pred_check_branch
      %11 = sbr.rel (0) target = $region5
    $region4: #{tpu_custom_call.1} parent=1 // pred_region
      %s13 = ssub.s32 16, 16
      %14 = vsyncadd [#allocation5], %s13
      %s16 = sshll.u32 [#allocation4], 4
      %s17 = int_to_ptr.vmem [resolvable:$true] %s16
      %19 = dma.hbm_to_vmem [thread:$0]  %s0, 16, %s17, [#allocation5]
    $region5: #{tpu_custom_call.1} parent=1 // pred_fallthru
      _
    // Predicated region
    $region6: #{tpu_custom_call.1} parent=1 // pred_check
      _
    $region7: #{tpu_custom_call.1} parent=1 // pred_check_branch
      %21 = sbr.rel (0) target = $region9
    $region8: #{tpu_custom_call.1} parent=1 // pred_region
      %s23 = ssub.s32 2048, 2048
      %24 = vsyncadd [#allocation8], %s23
      %s25 = sshll.u32 [#allocation7], 4
      %s26 = int_to_ptr.vmem [resolvable:$true] %s25
      %31 = dma.hbm_to_vmem [thread:$0]  %s1, 2048, %s26, [#allocation8], 128, 128, 8
    $region9: #{tpu_custom_call.1} parent=1 // pred_fallthru
      _
    // Predicated region
    $region10: #{tpu_custom_call.1} parent=1 // pred_check
      _
    $region11: #{tpu_custom_call.1} parent=1 // pred_check_branch
      %33 = sbr.rel (0) target = $region13
    $region12: #{tpu_custom_call.1} parent=1 // pred_region
      %34 = dma.done [#allocation5], 16
    $region13: #{tpu_custom_call.1} parent=1 // pred_fallthru
      _
    // Predicated region
    $region14: #{tpu_custom_call.1} parent=1 // pred_check
      _
    $region15: #{tpu_custom_call.1} parent=1 // pred_check_branch
      %36 = sbr.rel (0) target = $region17
    $region16: #{tpu_custom_call.1} parent=1 // pred_region
      %37 = dma.done [#allocation8], 2048
    $region17: #{tpu_custom_call.1} parent=1 // pred_fallthru
      _
    %p39 = scmp.eq.s32.totalorder 0, 0
    // Predicated region
    $region18: #{tpu_custom_call.1} parent=1 // pred_check
      %p40 = pneg %p39
    $region19: #{tpu_custom_call.1} parent=1 // pred_check_branch
      %42 = sbr.rel (%p40) target = $region21
    $region20: #{tpu_custom_call.1} parent=1 // pred_region
      %43 = vst [vmem:[#allocation2] sm:$0xff] 0.0
      %vm44 = vcmask 7168
      %45 = vst.msk [vmem:[#allocation3] sm:$0xff] %vm44, 0.0
    $region21: #{tpu_custom_call.1} parent=1 // pred_fallthru
      _
    %v46 = vld [vmem:[#allocation4] sm:$0x1]
    %v47 = vlaneseq
    %v48 = vshrl.u32 %v47, 7
    %s49 = smul.u32 0, 8
    %v50 = vstv %s49
    %v51 = vadd.s32 %v48, %v50
    %v52 = vlaneseq
    %v53 = vshrl.u32 %v52, 7
    %v54 = vsub.s32 0, %v53
    %v55 = vrot.slane %v46, %v54
    %vm56 = vcmp.eq.s32.totalorder %v51, %v55
    %v57 = vsel %vm56, 1, 0
    %v58 = vcvt.s32.f32 %v57
    %v59 = vpack.c.bf16 %v58, %v58
    %v60 = vld [vmem:[#allocation7] sm:$0xff]
    %v61 = vld [vmem:[#allocation7 + $0x8] sm:$0xff]
    %v62 = vld [vmem:[#allocation7 + $0x10] sm:$0xff]
    %v63 = vld [vmem:[#allocation7 + $0x18] sm:$0xff]
    %v64 = vld [vmem:[#allocation7 + $0x20] sm:$0xff]
    %v65 = vld [vmem:[#allocation7 + $0x28] sm:$0xff]
    %v66 = vld [vmem:[#allocation7 + $0x30] sm:$0xff]
    %v67 = vld [vmem:[#allocation7 + $0x38] sm:$0xff]
    %v68 = vld [vmem:[#allocation7 + $0x40] sm:$0xff]
    %v69 = vld [vmem:[#allocation7 + $0x48] sm:$0xff]
    %v70 = vld [vmem:[#allocation7 + $0x50] sm:$0xff]
    %v71 = vld [vmem:[#allocation7 + $0x58] sm:$0xff]
    %v72 = vld [vmem:[#allocation7 + $0x60] sm:$0xff]
    %v73 = vld [vmem:[#allocation7 + $0x68] sm:$0xff]
    %v74 = vld [vmem:[#allocation7 + $0x70] sm:$0xff]
    %v75 = vld [vmem:[#allocation7 + $0x78] sm:$0xff]
    %v76 = vpack.c.bf16 %v61, %v60
    %v77 = vpack.c.bf16 %v63, %v62
    %v78 = vpack.c.bf16 %v65, %v64
    %v79 = vpack.c.bf16 %v67, %v66
    %v80 = vpack.c.bf16 %v69, %v68
    %v81 = vpack.c.bf16 %v71, %v70
    %v82 = vpack.c.bf16 %v73, %v72
    %v83 = vpack.c.bf16 %v75, %v74
    %v84 = vld [vmem:[#allocation2] sm:$0xff]
    %85 = vmatprep.subr.bf16.mxu0 0
    %86 = vmatpush1.bf16.msra.mxu0 %v76
    %87 = vmatprep.subr.bf16.mxu0 0
    %88 = vmatpush1.bf16.msra.mxu0 %v77
    %89 = vmatprep.subr.bf16.mxu0 0
    %90 = vmatpush1.bf16.msra.mxu0 %v78
    %91 = vmatprep.subr.bf16.mxu0 0
    %92 = vmatpush1.bf16.msra.mxu0 %v79
    %93 = vmatprep.subr.bf16.mxu0 0
    %94 = vmatpush1.bf16.msra.mxu0 %v80
    %95 = vmatprep.subr.bf16.mxu0 0
    %96 = vmatpush1.bf16.msra.mxu0 %v81
    %97 = vmatprep.subr.bf16.mxu0 0
    %98 = vmatpush1.bf16.msra.mxu0 %v82
    %99 = vmatprep.subr.bf16.mxu0 0
    %100 = vmatpush1.bf16.msra.mxu0 %v83
    %101 = vmatprep.subr.bf16.mxu0 0
    %102 = vmatpush1.bf16.msra.mxu0 0
    %103 = vmatprep.subr.bf16.mxu0 0
    %104 = vmatpush1.bf16.msra.mxu0 0
    %105 = vmatprep.subr.bf16.mxu0 0
    %106 = vmatpush1.bf16.msra.mxu0 0
    %107 = vmatprep.subr.bf16.mxu0 0
    %108 = vmatpush1.bf16.msra.mxu0 0
    %109 = vmatprep.subr.bf16.mxu0 0
    %110 = vmatpush1.bf16.msra.mxu0 0
    %111 = vmatprep.subr.bf16.mxu0 0
    %112 = vmatpush1.bf16.msra.mxu0 0
    %113 = vmatprep.subr.bf16.mxu0 0
    %114 = vmatpush1.bf16.msra.mxu0 0
    %115 = vmatprep.subr.bf16.mxu0 0
    %116 = vmatpush1.bf16.msra.mxu0 0
    %117 = vmatprep.mubr.bf16.mxu0 0
    %118 = vmatmul.mubr.bf16.gmra.mrb[0].mxu0 %v59
    %v119 = vpop.f32.mrb[0].mxu0
    %v120 = vadd.f32 0.0, %v119
    %v121 = vpop.f32.mrb[0].mxu0
    %v122 = vpop.f32.mrb[0].mxu0
    %v123 = vpop.f32.mrb[0].mxu0
    %124 = vdwg.mxu0
    %v125 = vadd.f32 %v84, %v120
    %126 = vst [vmem:[#allocation2] sm:$0xff] %v125
    %v127 = vld [vmem:[#allocation3] sm:$0xff]
    %128 = vadd.xlane.f32.xlu0 %v58
    %v129 = vpop.xlane.xlu0 %128
    %v130 = vadd.f32 %v127, %v129
    %vm131 = vcmask 7168
    %132 = vst.msk [vmem:[#allocation3] sm:$0xff] %vm131, %v130
    // Predicated region
    $region22: #{tpu_custom_call.1} parent=1 // pred_check
      %p133 = pneg %p39
    $region23: #{tpu_custom_call.1} parent=1 // pred_check_branch
      %135 = sbr.rel (%p133) target = $region25
    $region24: #{tpu_custom_call.1} parent=1 // pred_region
      %v136 = vld [vmem:[#allocation3] sm:$0xff]
      %v137 = vmax.f32 %v136, 1.0
      %v138 = vrcp.pop %v137
      %v139 = vld [vmem:[#allocation2] sm:$0xff]
      %141 = vset.pattern.permute.xlu0 0
      %142 = vperm.xlu0 %141, %v138
      %v143 = vpop.permute.xlu0 %142
      %v145 = vmul.f32 %v139, %v143
      %146 = vst [vmem:[#allocation9] sm:$0xff] %v145
    $region25: #{tpu_custom_call.1} parent=1 // pred_fallthru
      _
    // Predicated region
    $region26: #{tpu_custom_call.1} parent=1 // pred_check
      _
    $region27: #{tpu_custom_call.1} parent=1 // pred_check_branch
      %148 = sbr.rel (0) target = $region29
    $region28: #{tpu_custom_call.1} parent=1 // pred_region
      %s150 = ssub.s32 128, 128
      %151 = vsyncadd [#allocation6], %s150
      %s153 = sshll.u32 [#allocation9], 4
      %s154 = int_to_ptr.vmem [resolvable:$true] %s153
      %156 = dma.vmem_to_hbm [thread:$0]  %s154, 128, %s2, [#allocation6]
    $region29: #{tpu_custom_call.1} parent=1 // pred_fallthru
      _
    // Predicated region
    $region30: #{tpu_custom_call.1} parent=1 // pred_check
      _
    $region31: #{tpu_custom_call.1} parent=1 // pred_check_branch
      %158 = sbr.rel (0) target = $region33
    $region32: #{tpu_custom_call.1} parent=1 // pred_region
      %159 = dma.done [#allocation6], 128
    $region33: #{tpu_custom_call.1} parent=1 // pred_fallthru
      _
    %160 = vsyncpa [#allocation5], 1
    %161 = vsyncpa [#allocation8], 1
    %162 = vsyncpa [#allocation6], 1

</llo_original>
